<compile_context>
chip_gen: v6e
topology: v6e:2x2x1
jax: 0.10.0
libtpu: 0.0.40
codegen_flags: <defaults>
</compile_context>

<pallas_src>
import functools

import numpy as np
import jax
import jax.numpy as jnp
from jax.experimental import pallas as pl
from jax.experimental.pallas import tpu as pltpu  # noqa: F401  (TPU backend)

EPS = 1e-5          # nn.BatchNorm2d default eps
ROWS_PER_BLOCK = 2  # output rows packed per lane row -> 128-lane-dense output


# ----------------------------- Pallas kernel -------------------------------

def _downsample_kernel(x_ref, b_ref, shift_ref, o_ref):
    """Fused stride-2 1x1 conv + folded BN, single step.

    x_ref:     (n_super, 2*stride*W*Cin)  bf16  = (8, 256) here
    b_ref:     (2*stride*W*Cin, 2*Wo*Cout) bf16 = (256, 128) block-diag packed weight
    shift_ref: (1, 2*Wo*Cout)             f32   folded BN shift (+ conv bias)
    o_ref:     (n_super, 2*Wo*Cout)       f32   = (8, 128): one full f32 tile
    """
    y = jnp.dot(x_ref[...], b_ref[...], preferred_element_type=jnp.float32)  # MXU
    o_ref[...] = (y + shift_ref[...]).astype(o_ref.dtype)                    # VPU add


# --------------------------- host-side param prep ----------------------------

def prepare_downsample_params(params, width, stride=2, eps=EPS):
    """Build (once, numpy) the packed sparse conv weight with BN scale folded in,
    plus the per-lane shift vector.

    Lane packing of one 'super row' (2 output rows):
      input : [rr(2)][row-phase(stride)][w(W)][cin]   -> 2*stride*W*Cin lanes
      output: [rr(2)][j(Wo)][cout]                    -> 2*Wo*Cout lanes
    B's zero structure performs the row/column decimation; the matmul does the
    1x1 conv and BN scale at the same time.
    """
    w_io = np.asarray(params["conv_w"], np.float32)           # (Cin, Cout)
    cin, cout = w_io.shape
    wo = width // stride

    s = np.asarray(params["bn_g"], np.float32) / np.sqrt(
        np.asarray(params["bn_v"], np.float32) + eps)
    shift_c = (np.asarray(params["bn_b"], np.float32)
               - np.asarray(params["bn_m"], np.float32) * s
               + np.asarray(params["conv_b"], np.float32) * s)
    w_scaled = w_io * s[None, :]                              # fold BN scale into weight

    lanes_in1 = stride * width * cin                          # 128 here
    lanes_out1 = wo * cout                                    # 64 here
    b1 = np.zeros((lanes_in1, lanes_out1), np.float32)
    for j in range(wo):
        r0 = (stride * j) * cin     # row-phase 0, even input column 2j, all Cin
        b1[r0:r0 + cin, j * cout:(j + 1) * cout] = w_scaled

    lanes_in = ROWS_PER_BLOCK * lanes_in1                     # 256
    lanes_out = ROWS_PER_BLOCK * lanes_out1                   # 128
    b_packed = np.zeros((lanes_in, lanes_out), np.float32)
    for rr in range(ROWS_PER_BLOCK):                          # block-diagonal expand
        b_packed[rr * lanes_in1:(rr + 1) * lanes_in1,
                 rr * lanes_out1:(rr + 1) * lanes_out1] = b1

    shift = np.tile(shift_c, ROWS_PER_BLOCK * wo).reshape(1, lanes_out)
    return (jnp.asarray(b_packed, jnp.bfloat16),
            jnp.asarray(shift, jnp.float32))


# ------------------------------ fused forward --------------------------------

@functools.partial(jax.jit, static_argnames=("stride",))
def downsample_forward(x_nchw, b_packed, shift, stride=2):
    """Matches DownSample.forward (eval-mode BN). Input/output layout: NCHW."""
    n, cin, h, w = x_nchw.shape
    assert h % stride == 0 and w % stride == 0
    ho, wo = h // stride, w // stride
    assert (n * ho) % ROWS_PER_BLOCK == 0
    lanes_in = ROWS_PER_BLOCK * stride * w * cin
    lanes_out = b_packed.shape[1]
    cout = lanes_out // (ROWS_PER_BLOCK * wo)
    n_super = (n * ho) // ROWS_PER_BLOCK
    assert lanes_in == b_packed.shape[0]

    # NCHW -> NHWC adapter + bf16 cast, then a FREE contiguous reshape that packs
    # 2 output rows' worth of input (4 input rows) onto the lane axis.
    x_nhwc = jnp.transpose(x_nchw, (0, 2, 3, 1)).astype(jnp.bfloat16)
    x_pack = x_nhwc.reshape(n_super, lanes_in)                 # (8, 256)

    out = pl.pallas_call(
        _downsample_kernel,
        out_shape=jax.ShapeDtypeStruct((n_super, lanes_out), jnp.float32),
        grid=(1,),                                             # single step
        in_specs=[
            pl.BlockSpec((n_super, lanes_in), lambda i: (0, 0)),
            pl.BlockSpec((lanes_in, lanes_out), lambda i: (0, 0)),
            pl.BlockSpec((1, lanes_out), lambda i: (0, 0)),
        ],
        out_specs=pl.BlockSpec((n_super, lanes_out), lambda i: (0, 0)),
    )(x_pack, b_packed, shift)

    # Free contiguous un-flatten (cout minor within each packed output row).
    out = out.reshape(n, ho, wo, cout)
    # TODO(synk): in a full network keep channels-last downstream (or fuse the
    # residual add here); this NCHW transpose only exists to match the module API.
    return jnp.transpose(out, (0, 3, 1, 2))


# ------------------------------- reference ----------------------------------

def reference_forward(x_nchw, params, stride=2):
    x = jnp.transpose(x_nchw, (0, 2, 3, 1))
    w = params["conv_w"].reshape(1, 1, *params["conv_w"].shape)      # HWIO
    y = jax.lax.conv_general_dilated(
        x, w, (stride, stride), "VALID", rhs_dilation=(stride, stride),
        dimension_numbers=("NHWC", "HWIO", "NHWC"))
    y = y + params["conv_b"]
    y = (params["bn_g"] * (y - params["bn_m"])
         / jnp.sqrt(params["bn_v"] + EPS) + params["bn_b"])
    return jnp.transpose(y, (0, 3, 1, 2))


# --------------------------------- main --------------------------------------

if __name__ == "__main__":
    key = jax.random.PRNGKey(0)
    ks = jax.random.split(key, 7)
    N, Cin, Cout, H, W = 2, 4, 8, 16, 16

    params = dict(
        conv_w=0.1 * jax.random.normal(ks[0], (Cin, Cout), jnp.float32),  # 1x1 conv (HWIO squeezed)
        conv_b=0.1 * jax.random.normal(ks[1], (Cout,), jnp.float32),
        bn_g=1.0 + 0.1 * jax.random.normal(ks[2], (Cout,), jnp.float32),
        bn_b=0.1 * jax.random.normal(ks[3], (Cout,), jnp.float32),
        bn_m=0.1 * jax.random.normal(ks[4], (Cout,), jnp.float32),
        bn_v=0.5 + jnp.abs(jax.random.normal(ks[5], (Cout,), jnp.float32)),
    )
    x = jax.random.normal(ks[6], (N, Cin, H, W), jnp.float32)

    # One-time host-side packing (cache and reuse across forward calls).
    b_packed, shift = prepare_downsample_params(params, width=W, stride=2)

    out = downsample_forward(x, b_packed, shift)
    out = jax.block_until_ready(out)
    assert out.shape == (N, Cout, H // 2, W // 2), out.shape

    ref = reference_forward(x, params)
    np.testing.assert_allclose(np.asarray(out), np.asarray(ref), rtol=2e-2, atol=2e-2)

    print("KERNEL_OK")
</pallas_src>

<mosaic_0001>
module attributes {stable_mosaic.version = 11 : i64} {
  func.func @_downsample_kernel(%arg0: i32, %arg1: memref<8x256xbf16, #tpu.memory_space<vmem>>, %arg2: memref<256x128xbf16, #tpu.memory_space<vmem>>, %arg3: memref<1x128xf32, #tpu.memory_space<vmem>>, %arg4: memref<8x128xf32, #tpu.memory_space<vmem>>) attributes {dimension_semantics = [#tpu.dimension_semantics<arbitrary>], iteration_bounds = array<i64: 1>, scalar_prefetch = 0 : i64, scratch_operands = 0 : i64, tpu.core_type = #tpu.core_type<tc>, window_params = [{pipeline_mode = #tpu.pipeline_mode<synchronous>, transform_indices = @transform_0, window_bounds = array<i64: 8, 256>}, {pipeline_mode = #tpu.pipeline_mode<synchronous>, transform_indices = @transform_1, window_bounds = array<i64: 256, 128>}, {pipeline_mode = #tpu.pipeline_mode<synchronous>, transform_indices = @transform_2, window_bounds = array<i64: 1, 128>}, {pipeline_mode = #tpu.pipeline_mode<synchronous>, transform_indices = @transform_3, window_bounds = array<i64: 8, 128>}]} {
    %c0 = arith.constant 0 : index
    %c0_0 = arith.constant 0 : index
    %0 = vector.load %arg1[%c0, %c0_0] : memref<8x256xbf16, #tpu.memory_space<vmem>>, vector<8x256xbf16>
    %c0_1 = arith.constant 0 : index
    %c0_2 = arith.constant 0 : index
    %1 = vector.load %arg2[%c0_1, %c0_2] : memref<256x128xbf16, #tpu.memory_space<vmem>>, vector<256x128xbf16>
    %cst = arith.constant dense<0.000000e+00> : vector<8x128xf32>
    %2 = tpu.matmul %0, %1, %cst {dimension_numbers = #tpu.dot_dimension_numbers<[1], [0], [0], [1], [0, 0, 1, 1], [], []>} : vector<8x256xbf16>, vector<256x128xbf16>, vector<8x128xf32> -> vector<8x128xf32>
    %c0_3 = arith.constant 0 : index
    %c0_4 = arith.constant 0 : index
    %3 = vector.load %arg3[%c0_3, %c0_4] : memref<1x128xf32, #tpu.memory_space<vmem>>, vector<1x128xf32>
    %4 = vector.broadcast %3 : vector<1x128xf32> to vector<8x128xf32>
    %5 = arith.addf %2, %4 : vector<8x128xf32>
    %c0_5 = arith.constant 0 : index
    %c0_6 = arith.constant 0 : index
    %6 = vector.load %arg4[%c0_5, %c0_6] : memref<8x128xf32, #tpu.memory_space<vmem>>, vector<8x128xf32>
    tpu.vector_store %arg4[%c0_5, %c0_6], %5 {strides = array<i32>} : memref<8x128xf32, #tpu.memory_space<vmem>>, vector<8x128xf32>,
    return
  }
  func.func @transform_0(%arg0: i32) -> (i32, i32) {
    %c0_i32 = arith.constant 0 : i32
    %c0_i32_0 = arith.constant 0 : i32
    %c0_i32_1 = arith.constant 0 : i32
    return %c0_i32, %c0_i32_0 : i32, i32
  }
  func.func @transform_1(%arg0: i32) -> (i32, i32) {
    %c0_i32 = arith.constant 0 : i32
    %c0_i32_0 = arith.constant 0 : i32
    %c0_i32_1 = arith.constant 0 : i32
    return %c0_i32, %c0_i32_0 : i32, i32
  }
  func.func @transform_2(%arg0: i32) -> (i32, i32) {
    %c0_i32 = arith.constant 0 : i32
    %c0_i32_0 = arith.constant 0 : i32
    %c0_i32_1 = arith.constant 0 : i32
    return %c0_i32, %c0_i32_0 : i32, i32
  }
  func.func @transform_3(%arg0: i32) -> (i32, i32) {
    %c0_i32 = arith.constant 0 : i32
    %c0_i32_0 = arith.constant 0 : i32
    %c0_i32_1 = arith.constant 0 : i32
    return %c0_i32, %c0_i32_0 : i32, i32
  }
}

</mosaic_0001>

<llo_original>
// kernel: downsample_forward.1
$region0: #{downsample_forward.1}
  #allocation0 [shape = 'u32[]', space=smem, size = 0x4, offset = 0x4, fixed_abs, tag = 'smem constant byte address 0x4 - core index']
  #allocation1 [shape = 'u32[144,128]{1,0:T(1,128)}', space=vmem, size = 0x12000, scoped, tag = 'internal scratch']
  %s0 = inlined_call_operand.vmem [shape: bf16[8,256], index: 0, kind: input, shape index: {}]
  %s1 = inlined_call_operand.vmem [shape: bf16[256,128], index: 1, kind: input, shape index: {}]
  %s2 = inlined_call_operand.vmem [shape: f32[1,128], index: 2, kind: input, shape index: {}]
  %s3 = inlined_call_operand.vmem [shape: f32[8,128], index: 3, kind: output, shape index: {}]
  %s4 = sld [smem:[#allocation0]]
  $region22: #{downsample_forward.1} parent=0
    _
  %s6 = ssub.s32 1, %s4
  %s7 = scalar_select 0, %s6, %s4
  // Predicated region
  $region2: #{downsample_forward.1} parent=0 // pred_check
    _
  $region3: #{downsample_forward.1} parent=0 // pred_check_branch
    %9 = sbr.rel (0) target = $region5
  $region4: #{downsample_forward.1} parent=0 // pred_region
    _
  $region5: #{downsample_forward.1} parent=0 // pred_fallthru
    _
  // Predicated region
  $region6: #{downsample_forward.1} parent=0 // pred_check
    _
  $region7: #{downsample_forward.1} parent=0 // pred_check_branch
    %11 = sbr.rel (0) target = $region9
  $region8: #{downsample_forward.1} parent=0 // pred_region
    _
  $region9: #{downsample_forward.1} parent=0 // pred_fallthru
    _
  // Predicated region
  $region10: #{downsample_forward.1} parent=0 // pred_check
    _
  $region11: #{downsample_forward.1} parent=0 // pred_check_branch
    %13 = sbr.rel (0) target = $region13
  $region12: #{downsample_forward.1} parent=0 // pred_region
    _
  $region13: #{downsample_forward.1} parent=0 // pred_fallthru
    _
  %v15 = vld [vmem:[%s0] sm:$0xff]
  %v16 = vld [vmem:[%s1] sm:$0xf]
  %v17 = vld [vmem:[%s1 + $0x4] sm:$0xf]
  %v18 = vld [vmem:[%s1 + $0x8] sm:$0xf]
  %v19 = vld [vmem:[%s1 + $0xc] sm:$0xf]
  %v20 = vld [vmem:[%s1 + $0x10] sm:$0xf]
  %v21 = vld [vmem:[%s1 + $0x14] sm:$0xf]
  %v22 = vld [vmem:[%s1 + $0x18] sm:$0xf]
  %v23 = vld [vmem:[%s1 + $0x1c] sm:$0xf]
  %v24 = vld [vmem:[%s1 + $0x20] sm:$0xf]
  %v25 = vld [vmem:[%s1 + $0x24] sm:$0xf]
  %v26 = vld [vmem:[%s1 + $0x28] sm:$0xf]
  %v27 = vld [vmem:[%s1 + $0x2c] sm:$0xf]
  %v28 = vld [vmem:[%s1 + $0x30] sm:$0xf]
  %v29 = vld [vmem:[%s1 + $0x34] sm:$0xf]
  %v30 = vld [vmem:[%s1 + $0x38] sm:$0xf]
  %v31 = vld [vmem:[%s1 + $0x3c] sm:$0xf]
  %v32 = vld [vmem:[%s1 + $0x40] sm:$0xf]
  %v33 = vld [vmem:[%s1 + $0x44] sm:$0xf]
  %v34 = vld [vmem:[%s1 + $0x48] sm:$0xf]
  %v35 = vld [vmem:[%s1 + $0x4c] sm:$0xf]
  %v36 = vld [vmem:[%s1 + $0x50] sm:$0xf]
  %v37 = vld [vmem:[%s1 + $0x54] sm:$0xf]
  %v38 = vld [vmem:[%s1 + $0x58] sm:$0xf]
  %v39 = vld [vmem:[%s1 + $0x5c] sm:$0xf]
  %v40 = vld [vmem:[%s1 + $0x60] sm:$0xf]
  %v41 = vld [vmem:[%s1 + $0x64] sm:$0xf]
  %v42 = vld [vmem:[%s1 + $0x68] sm:$0xf]
  %v43 = vld [vmem:[%s1 + $0x6c] sm:$0xf]
  %v44 = vld [vmem:[%s1 + $0x70] sm:$0xf]
  %v45 = vld [vmem:[%s1 + $0x74] sm:$0xf]
  %v46 = vld [vmem:[%s1 + $0x78] sm:$0xf]
  %v47 = vld [vmem:[%s1 + $0x7c] sm:$0xf]
  %v48 = vld [vmem:[%s2] sm:$0x1]
  %v50 = vlaneseq
  %v51 = vshrl.u32 %v50, 7
  %v52 = vsub.s32 0, %v51
  %v53 = vrot.slane %v48, %v52
  %v56 = vunpack.c.l.b16 %v15
  %v57 = vunpack.c.h.b16 %v15
  %v58 = vpack.c.b16 %v56, %v56
  %v59 = vpack.c.b16 %v57, %v57
  %v94 = vunpack.c.l.b16 %v16
  %v95 = vunpack.c.l.b16 %v17
  %v96 = vunpack.c.l.b16 %v18
  %v97 = vunpack.c.l.b16 %v19
  %v98 = vunpack.c.l.b16 %v20
  %v99 = vunpack.c.l.b16 %v21
  %v100 = vunpack.c.l.b16 %v22
  %v101 = vunpack.c.l.b16 %v23
  %v102 = vunpack.c.l.b16 %v24
  %v103 = vunpack.c.l.b16 %v25
  %v104 = vunpack.c.l.b16 %v26
  %v105 = vunpack.c.l.b16 %v27
  %v106 = vunpack.c.l.b16 %v28
  %v107 = vunpack.c.l.b16 %v29
  %v108 = vunpack.c.l.b16 %v30
  %v109 = vunpack.c.l.b16 %v31
  %v110 = vunpack.c.l.b16 %v32
  %v111 = vunpack.c.l.b16 %v33
  %v112 = vunpack.c.l.b16 %v34
  %v113 = vunpack.c.l.b16 %v35
  %v114 = vunpack.c.l.b16 %v36
  %v115 = vunpack.c.l.b16 %v37
  %v116 = vunpack.c.l.b16 %v38
  %v117 = vunpack.c.l.b16 %v39
  %v118 = vunpack.c.l.b16 %v40
  %v119 = vunpack.c.l.b16 %v41
  %v120 = vunpack.c.l.b16 %v42
  %v121 = vunpack.c.l.b16 %v43
  %v122 = vunpack.c.l.b16 %v44
  %v123 = vunpack.c.l.b16 %v45
  %v124 = vunpack.c.l.b16 %v46
  %v125 = vunpack.c.l.b16 %v47
  %v126 = vpack.c.b16 %v95, %v94
  %v127 = vpack.c.b16 %v97, %v96
  %v128 = vpack.c.b16 %v99, %v98
  %v129 = vpack.c.b16 %v101, %v100
  %v130 = vpack.c.b16 %v103, %v102
  %v131 = vpack.c.b16 %v105, %v104
  %v132 = vpack.c.b16 %v107, %v106
  %v133 = vpack.c.b16 %v109, %v108
  %v134 = vpack.c.b16 %v111, %v110
  %v135 = vpack.c.b16 %v113, %v112
  %v136 = vpack.c.b16 %v115, %v114
  %v137 = vpack.c.b16 %v117, %v116
  %v138 = vpack.c.b16 %v119, %v118
  %v139 = vpack.c.b16 %v121, %v120
  %v140 = vpack.c.b16 %v123, %v122
  %v141 = vpack.c.b16 %v125, %v124
  %158 = vmatprep.subr.bf16.mxu0 0
  %159 = vmatpush1.bf16.msra.mxu0 %v133
  %160 = vmatprep.subr.bf16.mxu0 0
  %161 = vmatpush1.bf16.msra.mxu0 %v132
  %162 = vmatprep.subr.bf16.mxu0 0
  %163 = vmatpush1.bf16.msra.mxu0 %v131
  %164 = vmatprep.subr.bf16.mxu0 0
  %165 = vmatpush1.bf16.msra.mxu0 %v130
  %166 = vmatprep.subr.bf16.mxu0 0
  %167 = vmatpush1.bf16.msra.mxu0 %v129
  %168 = vmatprep.subr.bf16.mxu0 0
  %169 = vmatpush1.bf16.msra.mxu0 %v128
  %170 = vmatprep.subr.bf16.mxu0 0
  %171 = vmatpush1.bf16.msra.mxu0 %v127
  %172 = vmatprep.subr.bf16.mxu0 0
  %173 = vmatpush1.bf16.msra.mxu0 %v126
  %174 = vmatprep.subr.bf16.mxu0 0
  %175 = vmatpush2.bf16.msra.mxu0 %v141
  %176 = vmatprep.subr.bf16.mxu0 0
  %177 = vmatpush2.bf16.msra.mxu0 %v140
  %178 = vmatprep.subr.bf16.mxu0 0
  %179 = vmatpush2.bf16.msra.mxu0 %v139
  %180 = vmatprep.subr.bf16.mxu0 0
  %181 = vmatpush2.bf16.msra.mxu0 %v138
  %182 = vmatprep.subr.bf16.mxu0 0
  %183 = vmatpush2.bf16.msra.mxu0 %v137
  %184 = vmatprep.subr.bf16.mxu0 0
  %185 = vmatpush2.bf16.msra.mxu0 %v136
  %186 = vmatprep.subr.bf16.mxu0 0
  %187 = vmatpush2.bf16.msra.mxu0 %v135
  %188 = vmatprep.subr.bf16.mxu0 0
  %189 = vmatpush2.bf16.msra.mxu0 %v134
  %190 = vmatprep.mubr.bf16.mxu0 %v59
  %191 = vmatmul.mubr.bf16.gmra.mxu0 %v58
  %v192 = vpop.f32.mrf.mxu0
  %v193 = vadd.f32 %v53, %v192
  %v194 = vpop.f32.mrf.mxu0
  %v195 = vpop.f32.mrf.mxu0
  %v196 = vpop.f32.mrf.mxu0
  %197 = vdwg.mxu0
  %198 = vst [vmem:[%s3] sm:$0xff] %v193
  // Predicated region
  $region14: #{downsample_forward.1} parent=0 // pred_check
    _
  $region15: #{downsample_forward.1} parent=0 // pred_check_branch
    %200 = sbr.rel (0) target = $region17
  $region16: #{downsample_forward.1} parent=0 // pred_region
    _
  $region17: #{downsample_forward.1} parent=0 // pred_fallthru
    _
  // Predicated region
  $region18: #{downsample_forward.1} parent=0 // pred_check
    _
  $region19: #{downsample_forward.1} parent=0 // pred_check_branch
    %202 = sbr.rel (0) target = $region21
  $region20: #{downsample_forward.1} parent=0 // pred_region
    _
  $region21: #{downsample_forward.1} parent=0 // pred_fallthru
    _

</llo_original>
